<compile_context>
chip_gen: v7x
topology: tpu7x:2x2x1
jax: 0.10.0
libtpu: 0.0.40
codegen_flags: <defaults>
</compile_context>

<pallas_src>
import math

import jax
import jax.numpy as jnp
from jax.experimental import pallas as pl
from jax.experimental.pallas import tpu as pltpu

_SQRT_HALF = 0.7071067811865476


def _round_up(v, m):
    return ((v + m - 1) // m) * m


def _erf(x):
    # Abramowitz & Stegun 7.1.26 polynomial erf (max abs err ~1.5e-7); exp goes
    # to the EUP, the rest is VPU f32.  (If a v5e bundle dump shows VALU-bound,
    # swap the divide for pl.reciprocal(1.0 + p*ax, approx=True) and re-check
    # the 1e-3 tolerance.)
    a1, a2, a3, a4, a5 = (0.254829592, -0.284496736, 1.421413741,
                          -1.453152027, 1.061405429)
    p = 0.3275911
    ax = jnp.abs(x)
    t = 1.0 / (1.0 + p * ax)
    poly = ((((a5 * t + a4) * t + a3) * t + a2) * t + a1) * t
    y = 1.0 - poly * jnp.exp(-ax * ax)
    return jnp.where(x >= 0.0, y, -y)


def _gelu_exact(x):
    # erf-based GELU == PyTorch nn.GELU default (approximate='none').
    return 0.5 * x * (1.0 + _erf(x * _SQRT_HALF))


def _mlp_kernel(x_ref, w1_ref, b1_ref, w2_ref, b2_ref, o_ref, acc_ref):
    k = pl.program_id(1)                           # hidden-dim chunk index

    @pl.when(k == 0)
    def _init():
        acc_ref[...] = jnp.zeros_like(acc_ref)

    # Cast the activation tile to bf16 on the VPU (hidden under the MXU) instead
    # of in the wrapper -> x is read from HBM exactly once, in f32.
    x_bf = x_ref[...].astype(jnp.bfloat16)
    # fc1 chunk: (TM, Din) @ (Din, TH) on the MXU, bf16 operands, f32 accumulate.
    h = jnp.dot(x_bf, w1_ref[...], preferred_element_type=jnp.float32)
    h = _gelu_exact(h + b1_ref[...])               # f32 epilogue on VPU/EUP
    # TODO(synk): nn.Dropout (p=0.0 default / eval mode) is an identity; a p>0
    # training path would need pltpu.prng_seed + prng_random_bits masking.
    # fc2 chunk: (TM, TH) @ (TH, Dout), accumulated in f32 scratch across chunks.
    acc_ref[...] += jnp.dot(h.astype(jnp.bfloat16), w2_ref[...],
                            preferred_element_type=jnp.float32)

    @pl.when(k == pl.num_programs(1) - 1)
    def _finalize():
        o_ref[...] = (acc_ref[...] + b2_ref[...]).astype(o_ref.dtype)


def _choose_tm(m, block_rows):
    """Row tile that divides m when possible (avoids wrapper pad + out slice)."""
    if m % block_rows == 0:
        return block_rows, m
    t = min(block_rows, m)
    t -= t % 8
    while t >= 8:
        if m % t == 0:
            return t, m
        t -= 8
    tm = min(block_rows, _round_up(m, 8))          # ragged: pad (extra HBM pass)
    return tm, _round_up(m, tm)


def _choose_th(d_in, d_hid, d_out, hidden_block):
    """Hidden-dim chunk.  Keep weights fully resident unless they'd crowd
    v7x's 64 MiB/TC VMEM, then stream H in 512-wide chunks."""
    if hidden_block is None:
        if (d_in * d_hid + d_hid * d_out) * 2 <= 24 * 1024 * 1024:
            return d_hid
        hidden_block = 512
    if d_hid % hidden_block != 0 or hidden_block % 128 != 0:
        return d_hid
    return hidden_block


def _default_vmem_limit_bytes():
    # ~85% of physical VMEM: ~108 MiB on v5e/v6e (128 MiB), ~54 MiB on v7x (64 MiB/TC).
    try:
        cap = int(pltpu.get_tpu_info().vmem_capacity_bytes)
    except Exception:
        cap = 64 * 1024 * 1024
    return min(int(cap * 0.85), 112 * 1024 * 1024)


def mlp_forward(x, params, *, block_rows=512, hidden_block=None,
                out_dtype=None, single_buffer_weights=True):
    """x: (..., D_in) float32 -> (..., D_out).  out_dtype=jnp.bfloat16 halves
    the writeback traffic if the consumer tolerates it (default: x.dtype)."""
    w1, b1, w2, b2 = params            # w1:(Din,H) b1:(H,) w2:(H,Dout) b2:(Dout,)
    lead = x.shape[:-1]
    d_in = x.shape[-1]
    d_hid = w1.shape[1]
    d_out = w2.shape[1]
    out_dtype = out_dtype or x.dtype

    m = int(math.prod(lead)) if lead else 1
    x2 = x.reshape(m, d_in)

    tm, m_pad = _choose_tm(m, block_rows)
    if m_pad != m:
        x2 = jnp.pad(x2, ((0, m_pad - m), (0, 0)))

    th = _choose_th(d_in, d_hid, d_out, hidden_block)
    h_blocks = d_hid // th
    grid = (m_pad // tm, h_blocks)

    # Weights should already be bf16 (init_params); cast only if they are not,
    # so the steady-state forward pays no per-call HBM pass over W1/W2.
    w1_bf = w1 if w1.dtype == jnp.bfloat16 else w1.astype(jnp.bfloat16)
    w2_bf = w2 if w2.dtype == jnp.bfloat16 else w2.astype(jnp.bfloat16)
    b1_f = b1.reshape(1, d_hid).astype(jnp.float32)
    b2_f = b2.reshape(1, d_out).astype(jnp.float32)

    vmem_limit = _default_vmem_limit_bytes()

    def build(single_buffer):
        def wspec(shape, index_map, invariant):
            # Single-buffer only truly grid-invariant operands (constant block).
            if single_buffer and invariant:
                return pl.BlockSpec(shape, index_map,
                                    pipeline_mode=pl.Buffered(buffer_count=1))
            return pl.BlockSpec(shape, index_map)

        weights_invariant = (h_blocks == 1)
        in_specs = [
            pl.BlockSpec((tm, d_in), lambda i, k: (i, 0)),        # x (f32), reused over k
            wspec((d_in, th), lambda i, k: (0, k), weights_invariant),
            wspec((1, th), lambda i, k: (0, k), weights_invariant),
            wspec((th, d_out), lambda i, k: (k, 0), weights_invariant),
            wspec((1, d_out), lambda i, k: (0, 0), True),         # b2 always invariant
        ]
        return pl.pallas_call(
            _mlp_kernel,
            out_shape=jax.ShapeDtypeStruct((m_pad, d_out), out_dtype),
            grid=grid,
            in_specs=in_specs,
            out_specs=pl.BlockSpec((tm, d_out), lambda i, k: (i, 0)),
            scratch_shapes=[pltpu.VMEM((tm, d_out), jnp.float32)],
            compiler_params=pltpu.CompilerParams(
                dimension_semantics=("parallel", "arbitrary"),
                vmem_limit_bytes=vmem_limit,
            ),
        )

    args = (x2, w1_bf, b1_f, w2_bf, b2_f)
    if single_buffer_weights:
        try:
            out = build(True)(*args)
        except Exception:
            # Older JAX without BlockSpec.pipeline_mode: default double-buffering.
            out = build(False)(*args)
    else:
        out = build(False)(*args)

    if m_pad != m:
        out = out[:m]
    return out.reshape(*lead, d_out)


def init_params(key, in_features, hidden_features, out_features):
    """PyTorch nn.Linear-style init; weights stored as (in, out) in bf16
    (MXU-ready, cast once here -> no per-forward HBM pass), biases in f32."""
    k1, k2, k3, k4 = jax.random.split(key, 4)
    bnd1 = 1.0 / math.sqrt(in_features)
    bnd2 = 1.0 / math.sqrt(hidden_features)
    w1 = jax.random.uniform(k1, (in_features, hidden_features), jnp.float32, -bnd1, bnd1)
    b1 = jax.random.uniform(k2, (hidden_features,), jnp.float32, -bnd1, bnd1)
    w2 = jax.random.uniform(k3, (hidden_features, out_features), jnp.float32, -bnd2, bnd2)
    b2 = jax.random.uniform(k4, (out_features,), jnp.float32, -bnd2, bnd2)
    return (w1.astype(jnp.bfloat16), b1, w2.astype(jnp.bfloat16), b2)


def mlp_ref(x, params):
    """Pure-JAX reference with the same bf16-operand / f32-accumulate recipe."""
    w1, b1, w2, b2 = params
    h = jnp.dot(x.astype(jnp.bfloat16), w1.astype(jnp.bfloat16),
                preferred_element_type=jnp.float32) + b1.astype(jnp.float32)
    h = jax.nn.gelu(h, approximate=False)     # exact (erf) GELU, like nn.GELU()
    o = jnp.dot(h.astype(jnp.bfloat16), w2.astype(jnp.bfloat16),
                preferred_element_type=jnp.float32) + b2.astype(jnp.float32)
    return o


if __name__ == "__main__":
    # Small but lane-aligned shapes (128/256 wide) so the demo exercises
    # unmasked stores and a real MXU pass; out_features defaults to in_features.
    B, N, D_IN, D_HID = 2, 8, 128, 256
    key = jax.random.PRNGKey(0)
    kx, kp = jax.random.split(key)
    params = init_params(kp, D_IN, D_HID, D_IN)
    x = jax.random.normal(kx, (B, N, D_IN), jnp.float32)

    out = mlp_forward(x, params)
    jax.block_until_ready(out)

    ref = mlp_ref(x, params)
    assert out.shape == (B, N, D_IN), out.shape
    max_err = float(jnp.max(jnp.abs(out - ref)))
    assert max_err < 1e-3, f"mismatch vs reference: {max_err}"
    print("KERNEL_OK")
</pallas_src>

<mosaic_0001>
module attributes {stable_mosaic.version = 11 : i64} {
  func.func @_mlp_kernel(%arg0: i32, %arg1: i32, %arg2: memref<16x128xf32, #tpu.memory_space<vmem>>, %arg3: memref<128x256xbf16, #tpu.memory_space<vmem>>, %arg4: memref<1x256xf32, #tpu.memory_space<vmem>>, %arg5: memref<256x128xbf16, #tpu.memory_space<vmem>>, %arg6: memref<1x128xf32, #tpu.memory_space<vmem>>, %arg7: memref<16x128xf32, #tpu.memory_space<vmem>>, %arg8: memref<16x128xf32, #tpu.memory_space<vmem>>) attributes {dimension_semantics = [#tpu.dimension_semantics<parallel>, #tpu.dimension_semantics<arbitrary>], iteration_bounds = array<i64: 1, 1>, scalar_prefetch = 0 : i64, scratch_operands = 1 : i64, tpu.core_type = #tpu.core_type<tc>, window_params = [{transform_indices = @transform_0, window_bounds = array<i64: 16, 128>}, {pipeline_mode = #tpu.pipeline_mode<synchronous>, transform_indices = @transform_1, window_bounds = array<i64: 128, 256>}, {pipeline_mode = #tpu.pipeline_mode<synchronous>, transform_indices = @transform_2, window_bounds = array<i64: 1, 256>}, {pipeline_mode = #tpu.pipeline_mode<synchronous>, transform_indices = @transform_3, window_bounds = array<i64: 256, 128>}, {pipeline_mode = #tpu.pipeline_mode<synchronous>, transform_indices = @transform_4, window_bounds = array<i64: 1, 128>}, {transform_indices = @transform_5, window_bounds = array<i64: 16, 128>}]} {
    %c0_i32 = arith.constant 0 : i32
    %0 = arith.cmpi eq, %arg1, %c0_i32 : i32
    %1 = arith.extui %0 : i1 to i32
    %c0_i32_0 = arith.constant 0 : i32
    %2 = arith.cmpi ne, %1, %c0_i32_0 : i32
    scf.if %2 {
      %cst_30 = arith.constant 0.000000e+00 : f32
      %59 = vector.broadcast %cst_30 : f32 to vector<16x128xf32>
      %c0_31 = arith.constant 0 : index
      %c0_32 = arith.constant 0 : index
      %60 = vector.load %arg8[%c0_31, %c0_32] : memref<16x128xf32, #tpu.memory_space<vmem>>, vector<16x128xf32>
      tpu.vector_store %arg8[%c0_31, %c0_32], %59 {strides = array<i32>} : memref<16x128xf32, #tpu.memory_space<vmem>>, vector<16x128xf32>,
    } else {
    }
    %c0 = arith.constant 0 : index
    %c0_1 = arith.constant 0 : index
    %3 = vector.load %arg2[%c0, %c0_1] : memref<16x128xf32, #tpu.memory_space<vmem>>, vector<16x128xf32>
    %4 = arith.truncf %3 : vector<16x128xf32> to vector<16x128xbf16>
    %c0_2 = arith.constant 0 : index
    %c0_3 = arith.constant 0 : index
    %5 = vector.load %arg3[%c0_2, %c0_3] : memref<128x256xbf16, #tpu.memory_space<vmem>>, vector<128x256xbf16>
    %cst = arith.constant dense<0.000000e+00> : vector<16x256xf32>
    %6 = tpu.matmul %4, %5, %cst {dimension_numbers = #tpu.dot_dimension_numbers<[1], [0], [0], [1], [0, 0, 1, 1], [], []>} : vector<16x128xbf16>, vector<128x256xbf16>, vector<16x256xf32> -> vector<16x256xf32>
    %c0_4 = arith.constant 0 : index
    %c0_5 = arith.constant 0 : index
    %7 = vector.load %arg4[%c0_4, %c0_5] : memref<1x256xf32, #tpu.memory_space<vmem>>, vector<1x256xf32>
    %8 = vector.broadcast %7 : vector<1x256xf32> to vector<16x256xf32>
    %9 = arith.addf %6, %8 : vector<16x256xf32>
    %cst_6 = arith.constant 5.000000e-01 : f32
    %10 = vector.broadcast %cst_6 : f32 to vector<16x256xf32>
    %11 = arith.mulf %10, %9 : vector<16x256xf32>
    %cst_7 = arith.constant 0.707106769 : f32
    %12 = vector.broadcast %cst_7 : f32 to vector<16x256xf32>
    %13 = arith.mulf %9, %12 : vector<16x256xf32>
    %14 = math.absf %13 : vector<16x256xf32>
    %cst_8 = arith.constant 0.327591091 : f32
    %15 = vector.broadcast %cst_8 : f32 to vector<16x256xf32>
    %16 = arith.mulf %15, %14 : vector<16x256xf32>
    %cst_9 = arith.constant 1.000000e+00 : f32
    %17 = vector.broadcast %cst_9 : f32 to vector<16x256xf32>
    %18 = arith.addf %17, %16 : vector<16x256xf32>
    %cst_10 = arith.constant 1.000000e+00 : f32
    %19 = vector.broadcast %cst_10 : f32 to vector<16x256xf32>
    %20 = arith.divf %19, %18 : vector<16x256xf32>
    %cst_11 = arith.constant 1.06140542 : f32
    %21 = vector.broadcast %cst_11 : f32 to vector<16x256xf32>
    %22 = arith.mulf %21, %20 : vector<16x256xf32>
    %cst_12 = arith.constant -1.45315206 : f32
    %23 = vector.broadcast %cst_12 : f32 to vector<16x256xf32>
    %24 = arith.addf %22, %23 : vector<16x256xf32>
    %25 = arith.mulf %24, %20 : vector<16x256xf32>
    %cst_13 = arith.constant 1.42141378 : f32
    %26 = vector.broadcast %cst_13 : f32 to vector<16x256xf32>
    %27 = arith.addf %25, %26 : vector<16x256xf32>
    %28 = arith.mulf %27, %20 : vector<16x256xf32>
    %cst_14 = arith.constant -0.284496725 : f32
    %29 = vector.broadcast %cst_14 : f32 to vector<16x256xf32>
    %30 = arith.addf %28, %29 : vector<16x256xf32>
    %31 = arith.mulf %30, %20 : vector<16x256xf32>
    %cst_15 = arith.constant 0.254829586 : f32
    %32 = vector.broadcast %cst_15 : f32 to vector<16x256xf32>
    %33 = arith.addf %31, %32 : vector<16x256xf32>
    %34 = arith.mulf %33, %20 : vector<16x256xf32>
    %cst_16 = arith.constant 0.000000e+00 : f32
    %35 = vector.broadcast %cst_16 : f32 to vector<16x256xf32>
    %36 = arith.subf %35, %14 : vector<16x256xf32>
    %37 = arith.mulf %36, %14 : vector<16x256xf32>
    %38 = math.exp %37 : vector<16x256xf32>
    %39 = arith.mulf %34, %38 : vector<16x256xf32>
    %cst_17 = arith.constant 1.000000e+00 : f32
    %40 = vector.broadcast %cst_17 : f32 to vector<16x256xf32>
    %41 = arith.subf %40, %39 : vector<16x256xf32>
    %cst_18 = arith.constant 0.000000e+00 : f32
    %42 = vector.broadcast %cst_18 : f32 to vector<16x256xf32>
    %43 = arith.cmpf oge, %13, %42 : vector<16x256xf32>
    %cst_19 = arith.constant 0.000000e+00 : f32
    %44 = vector.broadcast %cst_19 : f32 to vector<16x256xf32>
    %45 = arith.subf %44, %41 : vector<16x256xf32>
    %46 = arith.select %43, %41, %45 : vector<16x256xi1>, vector<16x256xf32>
    %cst_20 = arith.constant 1.000000e+00 : f32
    %47 = vector.broadcast %cst_20 : f32 to vector<16x256xf32>
    %48 = arith.addf %47, %46 : vector<16x256xf32>
    %49 = arith.mulf %11, %48 : vector<16x256xf32>
    %c0_21 = arith.constant 0 : index
    %c0_22 = arith.constant 0 : index
    %50 = vector.load %arg8[%c0_21, %c0_22] : memref<16x128xf32, #tpu.memory_space<vmem>>, vector<16x128xf32>
    %51 = arith.truncf %49 : vector<16x256xf32> to vector<16x256xbf16>
    %c0_23 = arith.constant 0 : index
    %c0_24 = arith.constant 0 : index
    %52 = vector.load %arg5[%c0_23, %c0_24] : memref<256x128xbf16, #tpu.memory_space<vmem>>, vector<256x128xbf16>
    %cst_25 = arith.constant dense<0.000000e+00> : vector<16x128xf32>
    %53 = tpu.matmul %51, %52, %cst_25 {dimension_numbers = #tpu.dot_dimension_numbers<[1], [0], [0], [1], [0, 0, 1, 1], [], []>} : vector<16x256xbf16>, vector<256x128xbf16>, vector<16x128xf32> -> vector<16x128xf32>
    %54 = arith.addf %50, %53 : vector<16x128xf32>
    %c0_26 = arith.constant 0 : index
    %c0_27 = arith.constant 0 : index
    %55 = vector.load %arg8[%c0_26, %c0_27] : memref<16x128xf32, #tpu.memory_space<vmem>>, vector<16x128xf32>
    tpu.vector_store %arg8[%c0_26, %c0_27], %54 {strides = array<i32>} : memref<16x128xf32, #tpu.memory_space<vmem>>, vector<16x128xf32>,
    %c0_i32_28 = arith.constant 0 : i32
    %56 = arith.cmpi eq, %arg1, %c0_i32_28 : i32
    %57 = arith.extui %56 : i1 to i32
    %c0_i32_29 = arith.constant 0 : i32
    %58 = arith.cmpi ne, %57, %c0_i32_29 : i32
    scf.if %58 {
      %c0_30 = arith.constant 0 : index
      %c0_31 = arith.constant 0 : index
      %59 = vector.load %arg8[%c0_30, %c0_31] : memref<16x128xf32, #tpu.memory_space<vmem>>, vector<16x128xf32>
      %c0_32 = arith.constant 0 : index
      %c0_33 = arith.constant 0 : index
      %60 = vector.load %arg6[%c0_32, %c0_33] : memref<1x128xf32, #tpu.memory_space<vmem>>, vector<1x128xf32>
      %61 = vector.broadcast %60 : vector<1x128xf32> to vector<16x128xf32>
      %62 = arith.addf %59, %61 : vector<16x128xf32>
      %c0_34 = arith.constant 0 : index
      %c0_35 = arith.constant 0 : index
      %63 = vector.load %arg7[%c0_34, %c0_35] : memref<16x128xf32, #tpu.memory_space<vmem>>, vector<16x128xf32>
      tpu.vector_store %arg7[%c0_34, %c0_35], %62 {strides = array<i32>} : memref<16x128xf32, #tpu.memory_space<vmem>>, vector<16x128xf32>,
    } else {
    }
    return
  }
  func.func @transform_0(%arg0: i32, %arg1: i32) -> (i32, i32) {
    %c0_i32 = arith.constant 0 : i32
    %c0_i32_0 = arith.constant 0 : i32
    return %arg0, %c0_i32 : i32, i32
  }
  func.func @transform_1(%arg0: i32, %arg1: i32) -> (i32, i32) {
    %c0_i32 = arith.constant 0 : i32
    %c0_i32_0 = arith.constant 0 : i32
    return %c0_i32, %arg1 : i32, i32
  }
  func.func @transform_2(%arg0: i32, %arg1: i32) -> (i32, i32) {
    %c0_i32 = arith.constant 0 : i32
    %c0_i32_0 = arith.constant 0 : i32
    return %c0_i32, %arg1 : i32, i32
  }
  func.func @transform_3(%arg0: i32, %arg1: i32) -> (i32, i32) {
    %c0_i32 = arith.constant 0 : i32
    %c0_i32_0 = arith.constant 0 : i32
    return %arg1, %c0_i32 : i32, i32
  }
  func.func @transform_4(%arg0: i32, %arg1: i32) -> (i32, i32) {
    %c0_i32 = arith.constant 0 : i32
    %c0_i32_0 = arith.constant 0 : i32
    %c0_i32_1 = arith.constant 0 : i32
    return %c0_i32, %c0_i32_0 : i32, i32
  }
  func.func @transform_5(%arg0: i32, %arg1: i32) -> (i32, i32) {
    %c0_i32 = arith.constant 0 : i32
    %c0_i32_0 = arith.constant 0 : i32
    return %arg0, %c0_i32 : i32, i32
  }
}

module attributes {stable_mosaic.version = 11 : i64} {
  func.func @_mlp_kernel(%arg0: i32, %arg1: i32, %arg2: memref<16x128xf32, #tpu.memory_space<vmem>>, %arg3: memref<128x256xbf16, #tpu.memory_space<vmem>>, %arg4: memref<1x256xf32, #tpu.memory_space<vmem>>, %arg5: memref<256x128xbf16, #tpu.memory_space<vmem>>, %arg6: memref<1x128xf32, #tpu.memory_space<vmem>>, %arg7: memref<16x128xf32, #tpu.memory_space<vmem>>, %arg8: memref<16x128xf32, #tpu.memory_space<vmem>>) attributes {dimension_semantics = [#tpu.dimension_semantics<parallel>, #tpu.dimension_semantics<arbitrary>], iteration_bounds = array<i64: 1, 1>, scalar_prefetch = 0 : i64, scratch_operands = 1 : i64, tpu.core_type = #tpu.core_type<tc>, window_params = [{transform_indices = @transform_0, window_bounds = array<i64: 16, 128>}, {transform_indices = @transform_1, window_bounds = array<i64: 128, 256>}, {transform_indices = @transform_2, window_bounds = array<i64: 1, 256>}, {transform_indices = @transform_3, window_bounds = array<i64: 256, 128>}, {pipeline_mode = #tpu.pipeline_mode<synchronous>, transform_indices = @transform_4, window_bounds = array<i64: 1, 128>}, {transform_indices = @transform_5, window_bounds = array<i64: 16, 128>}]} {
    %c0_i32 = arith.constant 0 : i32
    %0 = arith.cmpi eq, %arg1, %c0_i32 : i32
    %1 = arith.extui %0 : i1 to i32
    %c0_i32_0 = arith.constant 0 : i32
    %2 = arith.cmpi ne, %1, %c0_i32_0 : i32
    scf.if %2 {
      %cst_30 = arith.constant 0.000000e+00 : f32
      %59 = vector.broadcast %cst_30 : f32 to vector<16x128xf32>
      %c0_31 = arith.constant 0 : index
      %c0_32 = arith.constant 0 : index
      %60 = vector.load %arg8[%c0_31, %c0_32] : memref<16x128xf32, #tpu.memory_space<vmem>>, vector<16x128xf32>
      tpu.vector_store %arg8[%c0_31, %c0_32], %59 {strides = array<i32>} : memref<16x128xf32, #tpu.memory_space<vmem>>, vector<16x128xf32>,
    } else {
    }
    %c0 = arith.constant 0 : index
    %c0_1 = arith.constant 0 : index
    %3 = vector.load %arg2[%c0, %c0_1] : memref<16x128xf32, #tpu.memory_space<vmem>>, vector<16x128xf32>
    %4 = arith.truncf %3 : vector<16x128xf32> to vector<16x128xbf16>
    %c0_2 = arith.constant 0 : index
    %c0_3 = arith.constant 0 : index
    %5 = vector.load %arg3[%c0_2, %c0_3] : memref<128x256xbf16, #tpu.memory_space<vmem>>, vector<128x256xbf16>
    %cst = arith.constant dense<0.000000e+00> : vector<16x256xf32>
    %6 = tpu.matmul %4, %5, %cst {dimension_numbers = #tpu.dot_dimension_numbers<[1], [0], [0], [1], [0, 0, 1, 1], [], []>} : vector<16x128xbf16>, vector<128x256xbf16>, vector<16x256xf32> -> vector<16x256xf32>
    %c0_4 = arith.constant 0 : index
    %c0_5 = arith.constant 0 : index
    %7 = vector.load %arg4[%c0_4, %c0_5] : memref<1x256xf32, #tpu.memory_space<vmem>>, vector<1x256xf32>
    %8 = vector.broadcast %7 : vector<1x256xf32> to vector<16x256xf32>
    %9 = arith.addf %6, %8 : vector<16x256xf32>
    %cst_6 = arith.constant 5.000000e-01 : f32
    %10 = vector.broadcast %cst_6 : f32 to vector<16x256xf32>
    %11 = arith.mulf %10, %9 : vector<16x256xf32>
    %cst_7 = arith.constant 0.707106769 : f32
    %12 = vector.broadcast %cst_7 : f32 to vector<16x256xf32>
    %13 = arith.mulf %9, %12 : vector<16x256xf32>
    %14 = math.absf %13 : vector<16x256xf32>
    %cst_8 = arith.constant 0.327591091 : f32
    %15 = vector.broadcast %cst_8 : f32 to vector<16x256xf32>
    %16 = arith.mulf %15, %14 : vector<16x256xf32>
    %cst_9 = arith.constant 1.000000e+00 : f32
    %17 = vector.broadcast %cst_9 : f32 to vector<16x256xf32>
    %18 = arith.addf %17, %16 : vector<16x256xf32>
    %cst_10 = arith.constant 1.000000e+00 : f32
    %19 = vector.broadcast %cst_10 : f32 to vector<16x256xf32>
    %20 = arith.divf %19, %18 : vector<16x256xf32>
    %cst_11 = arith.constant 1.06140542 : f32
    %21 = vector.broadcast %cst_11 : f32 to vector<16x256xf32>
    %22 = arith.mulf %21, %20 : vector<16x256xf32>
    %cst_12 = arith.constant -1.45315206 : f32
    %23 = vector.broadcast %cst_12 : f32 to vector<16x256xf32>
    %24 = arith.addf %22, %23 : vector<16x256xf32>
    %25 = arith.mulf %24, %20 : vector<16x256xf32>
    %cst_13 = arith.constant 1.42141378 : f32
    %26 = vector.broadcast %cst_13 : f32 to vector<16x256xf32>
    %27 = arith.addf %25, %26 : vector<16x256xf32>
    %28 = arith.mulf %27, %20 : vector<16x256xf32>
    %cst_14 = arith.constant -0.284496725 : f32
    %29 = vector.broadcast %cst_14 : f32 to vector<16x256xf32>
    %30 = arith.addf %28, %29 : vector<16x256xf32>
    %31 = arith.mulf %30, %20 : vector<16x256xf32>
    %cst_15 = arith.constant 0.254829586 : f32
    %32 = vector.broadcast %cst_15 : f32 to vector<16x256xf32>
    %33 = arith.addf %31, %32 : vector<16x256xf32>
    %34 = arith.mulf %33, %20 : vector<16x256xf32>
    %cst_16 = arith.constant 0.000000e+00 : f32
    %35 = vector.broadcast %cst_16 : f32 to vector<16x256xf32>
    %36 = arith.subf %35, %14 : vector<16x256xf32>
    %37 = arith.mulf %36, %14 : vector<16x256xf32>
    %38 = math.exp %37 : vector<16x256xf32>
    %39 = arith.mulf %34, %38 : vector<16x256xf32>
    %cst_17 = arith.constant 1.000000e+00 : f32
    %40 = vector.broadcast %cst_17 : f32 to vector<16x256xf32>
    %41 = arith.subf %40, %39 : vector<16x256xf32>
    %cst_18 = arith.constant 0.000000e+00 : f32
    %42 = vector.broadcast %cst_18 : f32 to vector<16x256xf32>
    %43 = arith.cmpf oge, %13, %42 : vector<16x256xf32>
    %cst_19 = arith.constant 0.000000e+00 : f32
    %44 = vector.broadcast %cst_19 : f32 to vector<16x256xf32>
    %45 = arith.subf %44, %41 : vector<16x256xf32>
    %46 = arith.select %43, %41, %45 : vector<16x256xi1>, vector<16x256xf32>
    %cst_20 = arith.constant 1.000000e+00 : f32
    %47 = vector.broadcast %cst_20 : f32 to vector<16x256xf32>
    %48 = arith.addf %47, %46 : vector<16x256xf32>
    %49 = arith.mulf %11, %48 : vector<16x256xf32>
    %c0_21 = arith.constant 0 : index
    %c0_22 = arith.constant 0 : index
    %50 = vector.load %arg8[%c0_21, %c0_22] : memref<16x128xf32, #tpu.memory_space<vmem>>, vector<16x128xf32>
    %51 = arith.truncf %49 : vector<16x256xf32> to vector<16x256xbf16>
    %c0_23 = arith.constant 0 : index
    %c0_24 = arith.constant 0 : index
    %52 = vector.load %arg5[%c0_23, %c0_24] : memref<256x128xbf16, #tpu.memory_space<vmem>>, vector<256x128xbf16>
    %cst_25 = arith.constant dense<0.000000e+00> : vector<16x128xf32>
    %53 = tpu.matmul %51, %52, %cst_25 {dimension_numbers = #tpu.dot_dimension_numbers<[1], [0], [0], [1], [0, 0, 1, 1], [], []>} : vector<16x256xbf16>, vector<256x128xbf16>, vector<16x128xf32> -> vector<16x128xf32>
    %54 = arith.addf %50, %53 : vector<16x128xf32>
    %c0_26 = arith.constant 0 : index
    %c0_27 = arith.constant 0 : index
    %55 = vector.load %arg8[%c0_26, %c0_27] : memref<16x128xf32, #tpu.memory_space<vmem>>, vector<16x128xf32>
    tpu.vector_store %arg8[%c0_26, %c0_27], %54 {strides = array<i32>} : memref<16x128xf32, #tpu.memory_space<vmem>>, vector<16x128xf32>,
    %c0_i32_28 = arith.constant 0 : i32
    %56 = arith.cmpi eq, %arg1, %c0_i32_28 : i32
    %57 = arith.extui %56 : i1 to i32
    %c0_i32_29 = arith.constant 0 : i32
    %58 = arith.cmpi ne, %57, %c0_i32_29 : i32
    scf.if %58 {
      %c0_30 = arith.constant 0 : index
      %c0_31 = arith.constant 0 : index
      %59 = vector.load %arg8[%c0_30, %c0_31] : memref<16x128xf32, #tpu.memory_space<vmem>>, vector<16x128xf32>
      %c0_32 = arith.constant 0 : index
      %c0_33 = arith.constant 0 : index
      %60 = vector.load %arg6[%c0_32, %c0_33] : memref<1x128xf32, #tpu.memory_space<vmem>>, vector<1x128xf32>
      %61 = vector.broadcast %60 : vector<1x128xf32> to vector<16x128xf32>
      %62 = arith.addf %59, %61 : vector<16x128xf32>
      %c0_34 = arith.constant 0 : index
      %c0_35 = arith.constant 0 : index
      %63 = vector.load %arg7[%c0_34, %c0_35] : memref<16x128xf32, #tpu.memory_space<vmem>>, vector<16x128xf32>
      tpu.vector_store %arg7[%c0_34, %c0_35], %62 {strides = array<i32>} : memref<16x128xf32, #tpu.memory_space<vmem>>, vector<16x128xf32>,
    } else {
    }
    return
  }
  func.func @transform_0(%arg0: i32, %arg1: i32) -> (i32, i32) {
    %c0_i32 = arith.constant 0 : i32
    %c0_i32_0 = arith.constant 0 : i32
    return %arg0, %c0_i32 : i32, i32
  }
  func.func @transform_1(%arg0: i32, %arg1: i32) -> (i32, i32) {
    %c0_i32 = arith.constant 0 : i32
    %c0_i32_0 = arith.constant 0 : i32
    return %c0_i32, %arg1 : i32, i32
  }
  func.func @transform_2(%arg0: i32, %arg1: i32) -> (i32, i32) {
    %c0_i32 = arith.constant 0 : i32
    %c0_i32_0 = arith.constant 0 : i32
    return %c0_i32, %arg1 : i32, i32
  }
  func.func @transform_3(%arg0: i32, %arg1: i32) -> (i32, i32) {
    %c0_i32 = arith.constant 0 : i32
    %c0_i32_0 = arith.constant 0 : i32
    return %arg1, %c0_i32 : i32, i32
  }
  func.func @transform_4(%arg0: i32, %arg1: i32) -> (i32, i32) {
    %c0_i32 = arith.constant 0 : i32
    %c0_i32_0 = arith.constant 0 : i32
    %c0_i32_1 = arith.constant 0 : i32
    return %c0_i32, %c0_i32_0 : i32, i32
  }
  func.func @transform_5(%arg0: i32, %arg1: i32) -> (i32, i32) {
    %c0_i32 = arith.constant 0 : i32
    %c0_i32_0 = arith.constant 0 : i32
    return %arg0, %c0_i32 : i32, i32
  }
}

</mosaic_0001>

<llo_original>
// kernel: tpu_custom_call.1
$region0: #{tpu_custom_call.1}
  #allocation0 [shape = 'u32[]', space=smem, size = 0x4, offset = 0x4, fixed_abs, tag = 'smem constant byte address 0x4 - core index']
  #allocation1 [shape = 'u32[144,128]{1,0:T(1,128)}', space=vmem, size = 0x12000, scoped, tag = 'internal scratch']
  #allocation2 [shape = 'f32[16,128]{1,0:T(8,128)}', space=vmem, size = 0x2000, scoped, tag = 'scratch operand']
  %s0 = inlined_call_operand.hbm [shape: f32[16,128], index: 0, kind: input, shape index: {}]
  %s1 = inlined_call_operand.hbm [shape: bf16[128,256], index: 1, kind: input, shape index: {}]
  %s2 = inlined_call_operand.vmem [shape: f32[1,256], index: 2, kind: input, shape index: {}]
  %s3 = inlined_call_operand.hbm [shape: bf16[256,128], index: 3, kind: input, shape index: {}]
  %s4 = inlined_call_operand.vmem [shape: f32[1,128], index: 4, kind: input, shape index: {}]
  %s5 = inlined_call_operand.hbm [shape: f32[16,128], index: 5, kind: output, shape index: {}]
  %s6 = sld [smem:[#allocation0]]
  $region50: #{tpu_custom_call.1} parent=0
    _
  %s8 = ssub.s32 1, %s6
  %s9 = scalar_select 0, %s8, %s6
  $region1: #{tpu_custom_call.1} parent=0
    #allocation3 [shape = 'u8[8192]{0}', space=vmem, size = 0x2000, scoped, tag = 'input window, operand 0, single buffered']
    #allocation4 [shape = 's32[1]{0}', space=sflag, size = 0x4, scoped, tag = 'scoped memory for tpu_custom_call.1']
    #allocation5 [shape = 's32[1]{0}', space=sflag, size = 0x4, scoped, tag = 'scoped memory for tpu_custom_call.1']
    #allocation6 [shape = 'u8[65536]{0}', space=vmem, size = 0x10000, scoped, tag = 'input window, operand 1, single buffered']
    #allocation7 [shape = 's32[1]{0}', space=sflag, size = 0x4, scoped, tag = 'scoped memory for tpu_custom_call.1']
    #allocation8 [shape = 'u8[65536]{0}', space=vmem, size = 0x10000, scoped, tag = 'input window, operand 3, single buffered']
    #allocation9 [shape = 'u8[8192]{0}', space=vmem, size = 0x2000, scoped, tag = 'output window, operand 0, single buffered']
    %10 = vsyncpa [#allocation4], 0
    %11 = vsyncpa [#allocation7], 0
    %12 = vsyncpa [#allocation5], 0
    // Predicated region
    $region2: #{tpu_custom_call.1} parent=1 // pred_check
      _
    $region3: #{tpu_custom_call.1} parent=1 // pred_check_branch
      %14 = sbr.rel (0) target = $region5
    $region4: #{tpu_custom_call.1} parent=1 // pred_region
      %s16 = ssub.s32 256, 256
      %17 = vsyncadd [#allocation4], %s16
      %s18 = sshll.u32 [#allocation3], 4
      %s19 = int_to_ptr.vmem [resolvable:$true] %s18
      %24 = dma.hbm_to_vmem [thread:$0]  %s0, 256, %s19, [#allocation4], 128, 128, 8
    $region5: #{tpu_custom_call.1} parent=1 // pred_fallthru
      _
    // Predicated region
    $region6: #{tpu_custom_call.1} parent=1 // pred_check
      _
    $region7: #{tpu_custom_call.1} parent=1 // pred_check_branch
      %26 = sbr.rel (0) target = $region9
    $region8: #{tpu_custom_call.1} parent=1 // pred_region
      %s28 = ssub.s32 2048, 2048
      %29 = vsyncadd [#allocation7], %s28
      %s30 = sshll.u32 [#allocation6], 4
      %s31 = int_to_ptr.vmem [resolvable:$true] %s30
      %36 = dma.hbm_to_vmem [thread:$0]  %s1, 2048, %s31, [#allocation7], 128, 128, 8
    $region9: #{tpu_custom_call.1} parent=1 // pred_fallthru
      _
    // Predicated region
    $region10: #{tpu_custom_call.1} parent=1 // pred_check
      _
    $region11: #{tpu_custom_call.1} parent=1 // pred_check_branch
      %38 = sbr.rel (0) target = $region13
    $region12: #{tpu_custom_call.1} parent=1 // pred_region
      _
    $region13: #{tpu_custom_call.1} parent=1 // pred_fallthru
      _
    // Predicated region
    $region14: #{tpu_custom_call.1} parent=1 // pred_check
      _
    $region15: #{tpu_custom_call.1} parent=1 // pred_check_branch
      %40 = sbr.rel (0) target = $region17
    $region16: #{tpu_custom_call.1} parent=1 // pred_region
      %s42 = ssub.s32 2048, 2048
      %43 = vsyncadd [#allocation7], %s42
      %s44 = sshll.u32 [#allocation8], 4
      %s45 = int_to_ptr.vmem [resolvable:$true] %s44
      %50 = dma.hbm_to_vmem [thread:$0]  %s3, 2048, %s45, [#allocation7], 64, 64, 4
    $region17: #{tpu_custom_call.1} parent=1 // pred_fallthru
      _
    // Predicated region
    $region18: #{tpu_custom_call.1} parent=1 // pred_check
      _
    $region19: #{tpu_custom_call.1} parent=1 // pred_check_branch
      %52 = sbr.rel (0) target = $region21
    $region20: #{tpu_custom_call.1} parent=1 // pred_region
      _
    $region21: #{tpu_custom_call.1} parent=1 // pred_fallthru
      _
    // Predicated region
    $region22: #{tpu_custom_call.1} parent=1 // pred_check
      _
    $region23: #{tpu_custom_call.1} parent=1 // pred_check_branch
      %54 = sbr.rel (0) target = $region25
    $region24: #{tpu_custom_call.1} parent=1 // pred_region
      %55 = dma.done [#allocation4], 256
    $region25: #{tpu_custom_call.1} parent=1 // pred_fallthru
      _
    // Predicated region
    $region26: #{tpu_custom_call.1} parent=1 // pred_check
      _
    $region27: #{tpu_custom_call.1} parent=1 // pred_check_branch
      %57 = sbr.rel (0) target = $region29
    $region28: #{tpu_custom_call.1} parent=1 // pred_region
      %58 = dma.done [#allocation7], 2048
    $region29: #{tpu_custom_call.1} parent=1 // pred_fallthru
      _
    // Predicated region
    $region30: #{tpu_custom_call.1} parent=1 // pred_check
      _
    $region31: #{tpu_custom_call.1} parent=1 // pred_check_branch
      %60 = sbr.rel (0) target = $region33
    $region32: #{tpu_custom_call.1} parent=1 // pred_region
      %61 = dma.done [#allocation7], 2048
    $region33: #{tpu_custom_call.1} parent=1 // pred_fallthru
      _
    %p63 = scmp.eq.s32.totalorder 0, 0
    // Predicated region
    $region34: #{tpu_custom_call.1} parent=1 // pred_check
      %p64 = pneg %p63
    $region35: #{tpu_custom_call.1} parent=1 // pred_check_branch
      %66 = sbr.rel (%p64) target = $region37
    $region36: #{tpu_custom_call.1} parent=1 // pred_region
      %67 = vst [vmem:[#allocation2] sm:$0xff] 0.0
      %68 = vst [vmem:[#allocation2 + $0x8] sm:$0xff] 0.0
    $region37: #{tpu_custom_call.1} parent=1 // pred_fallthru
      _
    %v69 = vld [vmem:[#allocation3] sm:$0xff]
    %v70 = vld [vmem:[#allocation3 + $0x8] sm:$0xff]
    %v71 = vpack.c.bf16 %v70, %v69
    %v72 = vld [vmem:[#allocation6] sm:$0xff]
    %v73 = vld [vmem:[#allocation6 + $0x8] sm:$0xff]
    %v74 = vld [vmem:[#allocation6 + $0x10] sm:$0xff]
    %v75 = vld [vmem:[#allocation6 + $0x18] sm:$0xff]
    %v76 = vld [vmem:[#allocation6 + $0x20] sm:$0xff]
    %v77 = vld [vmem:[#allocation6 + $0x28] sm:$0xff]
    %v78 = vld [vmem:[#allocation6 + $0x30] sm:$0xff]
    %v79 = vld [vmem:[#allocation6 + $0x38] sm:$0xff]
    %v80 = vld [vmem:[#allocation6 + $0x40] sm:$0xff]
    %v81 = vld [vmem:[#allocation6 + $0x48] sm:$0xff]
    %v82 = vld [vmem:[#allocation6 + $0x50] sm:$0xff]
    %v83 = vld [vmem:[#allocation6 + $0x58] sm:$0xff]
    %v84 = vld [vmem:[#allocation6 + $0x60] sm:$0xff]
    %v85 = vld [vmem:[#allocation6 + $0x68] sm:$0xff]
    %v86 = vld [vmem:[#allocation6 + $0x70] sm:$0xff]
    %v87 = vld [vmem:[#allocation6 + $0x78] sm:$0xff]
    %v88 = vld [vmem:[%s2] sm:$0x3]
    %v90 = vlaneseq
    %v91 = vshrl.u32 %v90, 7
    %v92 = vsub.s32 0, %v91
    %v93 = vrot.slane %v88, %v92
    %v94 = vlaneseq
    %v95 = vshrl.u32 %v94, 7
    %v96 = vsub.s32 1, %v95
    %v97 = vrot.slane %v88, %v96
    %v116 = vunpack.c.l.b16 %v72
    %v117 = vunpack.c.h.b16 %v72
    %v118 = vunpack.c.l.b16 %v73
    %v119 = vunpack.c.h.b16 %v73
    %v120 = vunpack.c.l.b16 %v74
    %v121 = vunpack.c.h.b16 %v74
    %v122 = vunpack.c.l.b16 %v75
    %v123 = vunpack.c.h.b16 %v75
    %v124 = vunpack.c.l.b16 %v76
    %v125 = vunpack.c.h.b16 %v76
    %v126 = vunpack.c.l.b16 %v77
    %v127 = vunpack.c.h.b16 %v77
    %v128 = vunpack.c.l.b16 %v78
    %v129 = vunpack.c.h.b16 %v78
    %v130 = vunpack.c.l.b16 %v79
    %v131 = vunpack.c.h.b16 %v79
    %v132 = vunpack.c.l.b16 %v80
    %v133 = vunpack.c.h.b16 %v80
    %v134 = vunpack.c.l.b16 %v81
    %v135 = vunpack.c.h.b16 %v81
    %v136 = vunpack.c.l.b16 %v82
    %v137 = vunpack.c.h.b16 %v82
    %v138 = vunpack.c.l.b16 %v83
    %v139 = vunpack.c.h.b16 %v83
    %v140 = vunpack.c.l.b16 %v84
    %v141 = vunpack.c.h.b16 %v84
    %v142 = vunpack.c.l.b16 %v85
    %v143 = vunpack.c.h.b16 %v85
    %v144 = vunpack.c.l.b16 %v86
    %v145 = vunpack.c.h.b16 %v86
    %v146 = vunpack.c.l.b16 %v87
    %v147 = vunpack.c.h.b16 %v87
    %v148 = vpack.c.b16 %v118, %v116
    %v149 = vpack.c.b16 %v119, %v117
    %v150 = vpack.c.b16 %v122, %v120
    %v151 = vpack.c.b16 %v123, %v121
    %v152 = vpack.c.b16 %v126, %v124
    %v153 = vpack.c.b16 %v127, %v125
    %v154 = vpack.c.b16 %v130, %v128
    %v155 = vpack.c.b16 %v131, %v129
    %v156 = vpack.c.b16 %v134, %v132
    %v157 = vpack.c.b16 %v135, %v133
    %v158 = vpack.c.b16 %v138, %v136
    %v159 = vpack.c.b16 %v139, %v137
    %v160 = vpack.c.b16 %v142, %v140
    %v161 = vpack.c.b16 %v143, %v141
    %v162 = vpack.c.b16 %v146, %v144
    %v163 = vpack.c.b16 %v147, %v145
    %180 = vmatprep.subr.bf16.mxu0 %v149
    %181 = vmatpush1.bf16.msra.mxu0 %v148
    %182 = vmatprep.subr.bf16.mxu0 %v151
    %183 = vmatpush1.bf16.msra.mxu0 %v150
    %184 = vmatprep.subr.bf16.mxu0 %v153
    %185 = vmatpush1.bf16.msra.mxu0 %v152
    %186 = vmatprep.subr.bf16.mxu0 %v155
    %187 = vmatpush1.bf16.msra.mxu0 %v154
    %188 = vmatprep.subr.bf16.mxu0 %v157
    %189 = vmatpush1.bf16.msra.mxu0 %v156
    %190 = vmatprep.subr.bf16.mxu0 %v159
    %191 = vmatpush1.bf16.msra.mxu0 %v158
    %192 = vmatprep.subr.bf16.mxu0 %v161
    %193 = vmatpush1.bf16.msra.mxu0 %v160
    %194 = vmatprep.subr.bf16.mxu0 %v163
    %195 = vmatpush1.bf16.msra.mxu0 %v162
    %196 = vmatprep.subr.bf16.mxu0 0
    %197 = vmatpush1.bf16.msra.mxu0 0
    %198 = vmatprep.subr.bf16.mxu0 0
    %199 = vmatpush1.bf16.msra.mxu0 0
    %200 = vmatprep.subr.bf16.mxu0 0
    %201 = vmatpush1.bf16.msra.mxu0 0
    %202 = vmatprep.subr.bf16.mxu0 0
    %203 = vmatpush1.bf16.msra.mxu0 0
    %204 = vmatprep.subr.bf16.mxu0 0
    %205 = vmatpush1.bf16.msra.mxu0 0
    %206 = vmatprep.subr.bf16.mxu0 0
    %207 = vmatpush1.bf16.msra.mxu0 0
    %208 = vmatprep.subr.bf16.mxu0 0
    %209 = vmatpush1.bf16.msra.mxu0 0
    %210 = vmatprep.subr.bf16.mxu0 0
    %211 = vmatpush1.bf16.msra.mxu0 0
    %212 = vmatprep.mubr.bf16.mxu0 0
    %213 = vmatmul.mubr.bf16.gmra.mrb[0].mxu0 %v71
    %v214 = vpop.f32.mrb[0].mxu0
    %v215 = vadd.f32 %v93, %v214
    %v216 = vpop.f32.mrb[0].mxu0
    %v217 = vadd.f32 %v97, %v216
    %v218 = vpop.f32.mrb[0].mxu0
    %v219 = vadd.f32 %v93, %v218
    %v220 = vpop.f32.mrb[0].mxu0
    %v221 = vadd.f32 %v97, %v220
    %222 = vdwg.mxu0
    %v223 = vmul.f32 %v215, 0.5
    %v224 = vmul.f32 %v217, 0.5
    %v225 = vmul.f32 %v219, 0.5
    %v226 = vmul.f32 %v221, 0.5
    %v227 = vmul.f32 %v215, 0.70710677
    %v228 = vmul.f32 %v217, 0.70710677
    %v229 = vmul.f32 %v219, 0.70710677
    %v230 = vmul.f32 %v221, 0.70710677
    %v231 = vand.u32 2147483647, %v227
    %v232 = vand.u32 2147483647, %v228
    %v233 = vand.u32 2147483647, %v229
    %v234 = vand.u32 2147483647, %v230
    %v235 = vmul.f32 %v231, 0.3275911
    %v236 = vmul.f32 %v232, 0.3275911
    %v237 = vmul.f32 %v233, 0.3275911
    %v238 = vmul.f32 %v234, 0.3275911
    %v239 = vadd.f32 %v235, 1.0
    %v240 = vadd.f32 %v236, 1.0
    %v241 = vadd.f32 %v237, 1.0
    %v242 = vadd.f32 %v238, 1.0
    %v243 = vrcp.pop %v239
    %v244 = vmul.f32 1.0, %v243
    %v245 = vrcp.pop %v240
    %v246 = vmul.f32 1.0, %v245
    %v247 = vrcp.pop %v241
    %v248 = vmul.f32 1.0, %v247
    %v249 = vrcp.pop %v242
    %v250 = vmul.f32 1.0, %v249
    %v251 = vmul.f32 %v244, 1.0614054
    %v252 = vmul.f32 %v246, 1.0614054
    %v253 = vmul.f32 %v248, 1.0614054
    %v254 = vmul.f32 %v250, 1.0614054
    %v255 = vadd.f32 %v251, -1.4531521
    %v256 = vadd.f32 %v252, -1.4531521
    %v257 = vadd.f32 %v253, -1.4531521
    %v258 = vadd.f32 %v254, -1.4531521
    %v259 = vmul.f32 %v255, %v244
    %v260 = vmul.f32 %v256, %v246
    %v261 = vmul.f32 %v257, %v248
    %v262 = vmul.f32 %v258, %v250
    %v263 = vadd.f32 %v259, 1.4214138
    %v264 = vadd.f32 %v260, 1.4214138
    %v265 = vadd.f32 %v261, 1.4214138
    %v266 = vadd.f32 %v262, 1.4214138
    %v267 = vmul.f32 %v263, %v244
    %v268 = vmul.f32 %v264, %v246
    %v269 = vmul.f32 %v265, %v248
    %v270 = vmul.f32 %v266, %v250
    %v271 = vadd.f32 %v267, -0.28449672
    %v272 = vadd.f32 %v268, -0.28449672
    %v273 = vadd.f32 %v269, -0.28449672
    %v274 = vadd.f32 %v270, -0.28449672
    %v275 = vmul.f32 %v271, %v244
    %v276 = vmul.f32 %v272, %v246
    %v277 = vmul.f32 %v273, %v248
    %v278 = vmul.f32 %v274, %v250
    %v279 = vadd.f32 %v275, 0.2548296
    %v280 = vadd.f32 %v276, 0.2548296
    %v281 = vadd.f32 %v277, 0.2548296
    %v282 = vadd.f32 %v278, 0.2548296
    %v283 = vmul.f32 %v279, %v244
    %v284 = vmul.f32 %v280, %v246
    %v285 = vmul.f32 %v281, %v248
    %v286 = vmul.f32 %v282, %v250
    %v287 = vsub.f32 0.0, %v231
    %v288 = vsub.f32 0.0, %v232
    %v289 = vsub.f32 0.0, %v233
    %v290 = vsub.f32 0.0, %v234
    %v291 = vmul.f32 %v287, %v231
    %v292 = vmul.f32 %v288, %v232
    %v293 = vmul.f32 %v289, %v233
    %v294 = vmul.f32 %v290, %v234
    %v295 = vmul.f32 %v291, 1.442695
    %v296 = vpow.pop %v295
    %v297 = vmul.f32 %v292, 1.442695
    %v298 = vpow.pop %v297
    %v299 = vmul.f32 %v293, 1.442695
    %v300 = vpow.pop %v299
    %v301 = vmul.f32 %v294, 1.442695
    %v302 = vpow.pop %v301
    %v303 = vmul.f32 %v283, %v296
    %v304 = vmul.f32 %v284, %v298
    %v305 = vmul.f32 %v285, %v300
    %v306 = vmul.f32 %v286, %v302
    %v307 = vsub.f32 1.0, %v303
    %v308 = vsub.f32 1.0, %v304
    %v309 = vsub.f32 1.0, %v305
    %v310 = vsub.f32 1.0, %v306
    %vm311 = vcmp.ge.f32.partialorder %v227, 0.0
    %vm312 = vcmp.ge.f32.partialorder %v228, 0.0
    %vm313 = vcmp.ge.f32.partialorder %v229, 0.0
    %vm314 = vcmp.ge.f32.partialorder %v230, 0.0
    %v315 = vsub.f32 0.0, %v307
    %v316 = vsub.f32 0.0, %v308
    %v317 = vsub.f32 0.0, %v309
    %v318 = vsub.f32 0.0, %v310
    %v319 = vsel %vm311, %v307, %v315
    %v320 = vsel %vm312, %v308, %v316
    %v321 = vsel %vm313, %v309, %v317
    %v322 = vsel %vm314, %v310, %v318
    %v323 = vadd.f32 %v319, 1.0
    %v324 = vadd.f32 %v320, 1.0
    %v325 = vadd.f32 %v321, 1.0
    %v326 = vadd.f32 %v322, 1.0
    %v327 = vmul.f32 %v223, %v323
    %v328 = vmul.f32 %v224, %v324
    %v329 = vmul.f32 %v225, %v325
    %v330 = vmul.f32 %v226, %v326
    %v331 = vld [vmem:[#allocation2] sm:$0xff]
    %v332 = vld [vmem:[#allocation2 + $0x8] sm:$0xff]
    %v333 = vpack.c.bf16 %v329, %v327
    %v334 = vpack.c.bf16 %v330, %v328
    %v335 = vld [vmem:[#allocation8] sm:$0xf]
    %v336 = vld [vmem:[#allocation8 + $0x4] sm:$0xf]
    %v337 = vld [vmem:[#allocation8 + $0x8] sm:$0xf]
    %v338 = vld [vmem:[#allocation8 + $0xc] sm:$0xf]
    %v339 = vld [vmem:[#allocation8 + $0x10] sm:$0xf]
    %v340 = vld [vmem:[#allocation8 + $0x14] sm:$0xf]
    %v341 = vld [vmem:[#allocation8 + $0x18] sm:$0xf]
    %v342 = vld [vmem:[#allocation8 + $0x1c] sm:$0xf]
    %v343 = vld [vmem:[#allocation8 + $0x20] sm:$0xf]
    %v344 = vld [vmem:[#allocation8 + $0x24] sm:$0xf]
    %v345 = vld [vmem:[#allocation8 + $0x28] sm:$0xf]
    %v346 = vld [vmem:[#allocation8 + $0x2c] sm:$0xf]
    %v347 = vld [vmem:[#allocation8 + $0x30] sm:$0xf]
    %v348 = vld [vmem:[#allocation8 + $0x34] sm:$0xf]
    %v349 = vld [vmem:[#allocation8 + $0x38] sm:$0xf]
    %v350 = vld [vmem:[#allocation8 + $0x3c] sm:$0xf]
    %v351 = vld [vmem:[#allocation8 + $0x40] sm:$0xf]
    %v352 = vld [vmem:[#allocation8 + $0x44] sm:$0xf]
    %v353 = vld [vmem:[#allocation8 + $0x48] sm:$0xf]
    %v354 = vld [vmem:[#allocation8 + $0x4c] sm:$0xf]
    %v355 = vld [vmem:[#allocation8 + $0x50] sm:$0xf]
    %v356 = vld [vmem:[#allocation8 + $0x54] sm:$0xf]
    %v357 = vld [vmem:[#allocation8 + $0x58] sm:$0xf]
    %v358 = vld [vmem:[#allocation8 + $0x5c] sm:$0xf]
    %v359 = vld [vmem:[#allocation8 + $0x60] sm:$0xf]
    %v360 = vld [vmem:[#allocation8 + $0x64] sm:$0xf]
    %v361 = vld [vmem:[#allocation8 + $0x68] sm:$0xf]
    %v362 = vld [vmem:[#allocation8 + $0x6c] sm:$0xf]
    %v363 = vld [vmem:[#allocation8 + $0x70] sm:$0xf]
    %v364 = vld [vmem:[#allocation8 + $0x74] sm:$0xf]
    %v365 = vld [vmem:[#allocation8 + $0x78] sm:$0xf]
    %v366 = vld [vmem:[#allocation8 + $0x7c] sm:$0xf]
    %v399 = vunpack.c.l.b16 %v335
    %v400 = vunpack.c.l.b16 %v336
    %v401 = vunpack.c.l.b16 %v337
    %v402 = vunpack.c.l.b16 %v338
    %v403 = vunpack.c.l.b16 %v339
    %v404 = vunpack.c.l.b16 %v340
    %v405 = vunpack.c.l.b16 %v341
    %v406 = vunpack.c.l.b16 %v342
    %v407 = vunpack.c.l.b16 %v343
    %v408 = vunpack.c.l.b16 %v344
    %v409 = vunpack.c.l.b16 %v345
    %v410 = vunpack.c.l.b16 %v346
    %v411 = vunpack.c.l.b16 %v347
    %v412 = vunpack.c.l.b16 %v348
    %v413 = vunpack.c.l.b16 %v349
    %v414 = vunpack.c.l.b16 %v350
    %v415 = vunpack.c.l.b16 %v351
    %v416 = vunpack.c.l.b16 %v352
    %v417 = vunpack.c.l.b16 %v353
    %v418 = vunpack.c.l.b16 %v354
    %v419 = vunpack.c.l.b16 %v355
    %v420 = vunpack.c.l.b16 %v356
    %v421 = vunpack.c.l.b16 %v357
    %v422 = vunpack.c.l.b16 %v358
    %v423 = vunpack.c.l.b16 %v359
    %v424 = vunpack.c.l.b16 %v360
    %v425 = vunpack.c.l.b16 %v361
    %v426 = vunpack.c.l.b16 %v362
    %v427 = vunpack.c.l.b16 %v363
    %v428 = vunpack.c.l.b16 %v364
    %v429 = vunpack.c.l.b16 %v365
    %v430 = vunpack.c.l.b16 %v366
    %v431 = vpack.c.b16 %v400, %v399
    %v432 = vpack.c.b16 %v402, %v401
    %v433 = vpack.c.b16 %v404, %v403
    %v434 = vpack.c.b16 %v406, %v405
    %v435 = vpack.c.b16 %v408, %v407
    %v436 = vpack.c.b16 %v410, %v409
    %v437 = vpack.c.b16 %v412, %v411
    %v438 = vpack.c.b16 %v414, %v413
    %v439 = vpack.c.b16 %v416, %v415
    %v440 = vpack.c.b16 %v418, %v417
    %v441 = vpack.c.b16 %v420, %v419
    %v442 = vpack.c.b16 %v422, %v421
    %v443 = vpack.c.b16 %v424, %v423
    %v444 = vpack.c.b16 %v426, %v425
    %v445 = vpack.c.b16 %v428, %v427
    %v446 = vpack.c.b16 %v430, %v429
    %463 = vmatprep.subr.bf16.mxu0 0
    %464 = vmatpush1.bf16.msra.mxu0 %v431
    %465 = vmatprep.subr.bf16.mxu0 0
    %466 = vmatpush1.bf16.msra.mxu0 %v432
    %467 = vmatprep.subr.bf16.mxu0 0
    %468 = vmatpush1.bf16.msra.mxu0 %v433
    %469 = vmatprep.subr.bf16.mxu0 0
    %470 = vmatpush1.bf16.msra.mxu0 %v434
    %471 = vmatprep.subr.bf16.mxu0 0
    %472 = vmatpush1.bf16.msra.mxu0 %v435
    %473 = vmatprep.subr.bf16.mxu0 0
    %474 = vmatpush1.bf16.msra.mxu0 %v436
    %475 = vmatprep.subr.bf16.mxu0 0
    %476 = vmatpush1.bf16.msra.mxu0 %v437
    %477 = vmatprep.subr.bf16.mxu0 0
    %478 = vmatpush1.bf16.msra.mxu0 %v438
    %479 = vmatprep.subr.bf16.mxu0 0
    %480 = vmatpush1.bf16.msra.mxu0 %v439
    %481 = vmatprep.subr.bf16.mxu0 0
    %482 = vmatpush1.bf16.msra.mxu0 %v440
    %483 = vmatprep.subr.bf16.mxu0 0
    %484 = vmatpush1.bf16.msra.mxu0 %v441
    %485 = vmatprep.subr.bf16.mxu0 0
    %486 = vmatpush1.bf16.msra.mxu0 %v442
    %487 = vmatprep.subr.bf16.mxu0 0
    %488 = vmatpush1.bf16.msra.mxu0 %v443
    %489 = vmatprep.subr.bf16.mxu0 0
    %490 = vmatpush1.bf16.msra.mxu0 %v444
    %491 = vmatprep.subr.bf16.mxu0 0
    %492 = vmatpush1.bf16.msra.mxu0 %v445
    %493 = vmatprep.subr.bf16.mxu0 0
    %494 = vmatpush1.bf16.msra.mxu0 %v446
    %495 = vmatprep.mubr.bf16.mxu0 %v334
    %496 = vmatmul.mubr.bf16.gmra.mrb[0].mxu0 %v333
    %v497 = vpop.f32.mrb[0].mxu0
    %v498 = vadd.f32 0.0, %v497
    %v499 = vpop.f32.mrb[0].mxu0
    %v500 = vpop.f32.mrb[0].mxu0
    %v501 = vadd.f32 0.0, %v500
    %v502 = vpop.f32.mrb[0].mxu0
    %503 = vdwg.mxu0
    %v504 = vadd.f32 %v331, %v498
    %v505 = vadd.f32 %v332, %v501
    %506 = vst [vmem:[#allocation2] sm:$0xff] %v504
    %507 = vst [vmem:[#allocation2 + $0x8] sm:$0xff] %v505
    // Predicated region
    $region38: #{tpu_custom_call.1} parent=1 // pred_check
      %p508 = pneg %p63
    $region39: #{tpu_custom_call.1} parent=1 // pred_check_branch
      %510 = sbr.rel (%p508) target = $region41
    $region40: #{tpu_custom_call.1} parent=1 // pred_region
      %v511 = vld [vmem:[#allocation2] sm:$0xff]
      %v512 = vld [vmem:[#allocation2 + $0x8] sm:$0xff]
      %v513 = vld [vmem:[%s4] sm:$0x1]
      %v515 = vlaneseq
      %v516 = vshrl.u32 %v515, 7
      %v517 = vsub.s32 0, %v516
      %v518 = vrot.slane %v513, %v517
      %v520 = vadd.f32 %v511, %v518
      %v521 = vadd.f32 %v512, %v518
      %522 = vst [vmem:[#allocation9] sm:$0xff] %v520
      %523 = vst [vmem:[#allocation9 + $0x8] sm:$0xff] %v521
    $region41: #{tpu_custom_call.1} parent=1 // pred_fallthru
      _
    // Predicated region
    $region42: #{tpu_custom_call.1} parent=1 // pred_check
      _
    $region43: #{tpu_custom_call.1} parent=1 // pred_check_branch
      %525 = sbr.rel (0) target = $region45
    $region44: #{tpu_custom_call.1} parent=1 // pred_region
      %s527 = ssub.s32 256, 256
      %528 = vsyncadd [#allocation5], %s527
      %s529 = sshll.u32 [#allocation9], 4
      %s530 = int_to_ptr.vmem [resolvable:$true] %s529
      %535 = dma.vmem_to_hbm [thread:$0]  %s530, 256, %s5, [#allocation5], 128, 128, 8
    $region45: #{tpu_custom_call.1} parent=1 // pred_fallthru
      _
    // Predicated region
    $region46: #{tpu_custom_call.1} parent=1 // pred_check
      _
    $region47: #{tpu_custom_call.1} parent=1 // pred_check_branch
      %537 = sbr.rel (0) target = $region49
    $region48: #{tpu_custom_call.1} parent=1 // pred_region
      %538 = dma.done [#allocation5], 256
    $region49: #{tpu_custom_call.1} parent=1 // pred_fallthru
      _
    %539 = vsyncpa [#allocation4], 1
    %540 = vsyncpa [#allocation7], 1
    %541 = vsyncpa [#allocation5], 1

// kernel: tpu_custom_call.1
$region0: #{tpu_custom_call.1}
  #allocation0 [shape = 'u32[]', space=smem, size = 0x4, offset = 0x4, fixed_abs, tag = 'smem constant byte address 0x4 - core index']
  #allocation1 [shape = 'u32[144,128]{1,0:T(1,128)}', space=vmem, size = 0x12000, scoped, tag = 'internal scratch']
  #allocation2 [shape = 'f32[16,128]{1,0:T(8,128)}', space=vmem, size = 0x2000, scoped, tag = 'scratch operand']
  %s0 = inlined_call_operand.hbm [shape: f32[16,128], index: 0, kind: input, shape index: {}]
  %s1 = inlined_call_operand.hbm [shape: bf16[128,256], index: 1, kind: input, shape index: {}]
  %s2 = inlined_call_operand.vmem [shape: f32[1,256], index: 2, kind: input, shape index: {}]
  %s3 = inlined_call_operand.hbm [shape: bf16[256,128], index: 3, kind: input, shape index: {}]
  %s4 = inlined_call_operand.vmem [shape: f32[1,128], index: 4, kind: input, shape index: {}]
  %s5 = inlined_call_operand.hbm [shape: f32[16,128], index: 5, kind: output, shape index: {}]
  %s6 = sld [smem:[#allocation0]]
  $region50: #{tpu_custom_call.1} parent=0
    _
  %s8 = ssub.s32 1, %s6
  %s9 = scalar_select 0, %s8, %s6
  $region1: #{tpu_custom_call.1} parent=0
    #allocation3 [shape = 'u8[8192]{0}', space=vmem, size = 0x2000, scoped, tag = 'input window, operand 0, single buffered']
    #allocation4 [shape = 's32[1]{0}', space=sflag, size = 0x4, scoped, tag = 'scoped memory for tpu_custom_call.1']
    #allocation5 [shape = 's32[1]{0}', space=sflag, size = 0x4, scoped, tag = 'scoped memory for tpu_custom_call.1']
    #allocation6 [shape = 'u8[65536]{0}', space=vmem, size = 0x10000, scoped, tag = 'input window, operand 1, single buffered']
    #allocation7 [shape = 's32[1]{0}', space=sflag, size = 0x4, scoped, tag = 'scoped memory for tpu_custom_call.1']
    #allocation8 [shape = 'u8[65536]{0}', space=vmem, size = 0x10000, scoped, tag = 'input window, operand 3, single buffered']
    #allocation9 [shape = 'u8[8192]{0}', space=vmem, size = 0x2000, scoped, tag = 'output window, operand 0, single buffered']
    %10 = vsyncpa [#allocation4], 0
    %11 = vsyncpa [#allocation7], 0
    %12 = vsyncpa [#allocation5], 0
    // Predicated region
    $region2: #{tpu_custom_call.1} parent=1 // pred_check
      _
    $region3: #{tpu_custom_call.1} parent=1 // pred_check_branch
      %14 = sbr.rel (0) target = $region5
    $region4: #{tpu_custom_call.1} parent=1 // pred_region
      %s16 = ssub.s32 256, 256
      %17 = vsyncadd [#allocation4], %s16
      %s18 = sshll.u32 [#allocation3], 4
      %s19 = int_to_ptr.vmem [resolvable:$true] %s18
      %24 = dma.hbm_to_vmem [thread:$0]  %s0, 256, %s19, [#allocation4], 128, 128, 8
    $region5: #{tpu_custom_call.1} parent=1 // pred_fallthru
      _
    // Predicated region
    $region6: #{tpu_custom_call.1} parent=1 // pred_check
      _
    $region7: #{tpu_custom_call.1} parent=1 // pred_check_branch
      %26 = sbr.rel (0) target = $region9
    $region8: #{tpu_custom_call.1} parent=1 // pred_region
      %s28 = ssub.s32 2048, 2048
      %29 = vsyncadd [#allocation7], %s28
      %s30 = sshll.u32 [#allocation6], 4
      %s31 = int_to_ptr.vmem [resolvable:$true] %s30
      %36 = dma.hbm_to_vmem [thread:$0]  %s1, 2048, %s31, [#allocation7], 128, 128, 8
    $region9: #{tpu_custom_call.1} parent=1 // pred_fallthru
      _
    // Predicated region
    $region10: #{tpu_custom_call.1} parent=1 // pred_check
      _
    $region11: #{tpu_custom_call.1} parent=1 // pred_check_branch
      %38 = sbr.rel (0) target = $region13
    $region12: #{tpu_custom_call.1} parent=1 // pred_region
      _
    $region13: #{tpu_custom_call.1} parent=1 // pred_fallthru
      _
    // Predicated region
    $region14: #{tpu_custom_call.1} parent=1 // pred_check
      _
    $region15: #{tpu_custom_call.1} parent=1 // pred_check_branch
      %40 = sbr.rel (0) target = $region17
    $region16: #{tpu_custom_call.1} parent=1 // pred_region
      %s42 = ssub.s32 2048, 2048
      %43 = vsyncadd [#allocation7], %s42
      %s44 = sshll.u32 [#allocation8], 4
      %s45 = int_to_ptr.vmem [resolvable:$true] %s44
      %50 = dma.hbm_to_vmem [thread:$0]  %s3, 2048, %s45, [#allocation7], 64, 64, 4
    $region17: #{tpu_custom_call.1} parent=1 // pred_fallthru
      _
    // Predicated region
    $region18: #{tpu_custom_call.1} parent=1 // pred_check
      _
    $region19: #{tpu_custom_call.1} parent=1 // pred_check_branch
      %52 = sbr.rel (0) target = $region21
    $region20: #{tpu_custom_call.1} parent=1 // pred_region
      _
    $region21: #{tpu_custom_call.1} parent=1 // pred_fallthru
      _
    // Predicated region
    $region22: #{tpu_custom_call.1} parent=1 // pred_check
      _
    $region23: #{tpu_custom_call.1} parent=1 // pred_check_branch
      %54 = sbr.rel (0) target = $region25
    $region24: #{tpu_custom_call.1} parent=1 // pred_region
      %55 = dma.done [#allocation4], 256
    $region25: #{tpu_custom_call.1} parent=1 // pred_fallthru
      _
    // Predicated region
    $region26: #{tpu_custom_call.1} parent=1 // pred_check
      _
    $region27: #{tpu_custom_call.1} parent=1 // pred_check_branch
      %57 = sbr.rel (0) target = $region29
    $region28: #{tpu_custom_call.1} parent=1 // pred_region
      %58 = dma.done [#allocation7], 2048
    $region29: #{tpu_custom_call.1} parent=1 // pred_fallthru
      _
    // Predicated region
    $region30: #{tpu_custom_call.1} parent=1 // pred_check
      _
    $region31: #{tpu_custom_call.1} parent=1 // pred_check_branch
      %60 = sbr.rel (0) target = $region33
    $region32: #{tpu_custom_call.1} parent=1 // pred_region
      %61 = dma.done [#allocation7], 2048
    $region33: #{tpu_custom_call.1} parent=1 // pred_fallthru
      _
    %p63 = scmp.eq.s32.totalorder 0, 0
    // Predicated region
    $region34: #{tpu_custom_call.1} parent=1 // pred_check
      %p64 = pneg %p63
    $region35: #{tpu_custom_call.1} parent=1 // pred_check_branch
      %66 = sbr.rel (%p64) target = $region37
    $region36: #{tpu_custom_call.1} parent=1 // pred_region
      %67 = vst [vmem:[#allocation2] sm:$0xff] 0.0
      %68 = vst [vmem:[#allocation2 + $0x8] sm:$0xff] 0.0
    $region37: #{tpu_custom_call.1} parent=1 // pred_fallthru
      _
    %v69 = vld [vmem:[#allocation3] sm:$0xff]
    %v70 = vld [vmem:[#allocation3 + $0x8] sm:$0xff]
    %v71 = vpack.c.bf16 %v70, %v69
    %v72 = vld [vmem:[#allocation6] sm:$0xff]
    %v73 = vld [vmem:[#allocation6 + $0x8] sm:$0xff]
    %v74 = vld [vmem:[#allocation6 + $0x10] sm:$0xff]
    %v75 = vld [vmem:[#allocation6 + $0x18] sm:$0xff]
    %v76 = vld [vmem:[#allocation6 + $0x20] sm:$0xff]
    %v77 = vld [vmem:[#allocation6 + $0x28] sm:$0xff]
    %v78 = vld [vmem:[#allocation6 + $0x30] sm:$0xff]
    %v79 = vld [vmem:[#allocation6 + $0x38] sm:$0xff]
    %v80 = vld [vmem:[#allocation6 + $0x40] sm:$0xff]
    %v81 = vld [vmem:[#allocation6 + $0x48] sm:$0xff]
    %v82 = vld [vmem:[#allocation6 + $0x50] sm:$0xff]
    %v83 = vld [vmem:[#allocation6 + $0x58] sm:$0xff]
    %v84 = vld [vmem:[#allocation6 + $0x60] sm:$0xff]
    %v85 = vld [vmem:[#allocation6 + $0x68] sm:$0xff]
    %v86 = vld [vmem:[#allocation6 + $0x70] sm:$0xff]
    %v87 = vld [vmem:[#allocation6 + $0x78] sm:$0xff]
    %v88 = vld [vmem:[%s2] sm:$0x3]
    %v90 = vlaneseq
    %v91 = vshrl.u32 %v90, 7
    %v92 = vsub.s32 0, %v91
    %v93 = vrot.slane %v88, %v92
    %v94 = vlaneseq
    %v95 = vshrl.u32 %v94, 7
    %v96 = vsub.s32 1, %v95
    %v97 = vrot.slane %v88, %v96
    %v116 = vunpack.c.l.b16 %v72
    %v117 = vunpack.c.h.b16 %v72
    %v118 = vunpack.c.l.b16 %v73
    %v119 = vunpack.c.h.b16 %v73
    %v120 = vunpack.c.l.b16 %v74
    %v121 = vunpack.c.h.b16 %v74
    %v122 = vunpack.c.l.b16 %v75
    %v123 = vunpack.c.h.b16 %v75
    %v124 = vunpack.c.l.b16 %v76
    %v125 = vunpack.c.h.b16 %v76
    %v126 = vunpack.c.l.b16 %v77
    %v127 = vunpack.c.h.b16 %v77
    %v128 = vunpack.c.l.b16 %v78
    %v129 = vunpack.c.h.b16 %v78
    %v130 = vunpack.c.l.b16 %v79
    %v131 = vunpack.c.h.b16 %v79
    %v132 = vunpack.c.l.b16 %v80
    %v133 = vunpack.c.h.b16 %v80
    %v134 = vunpack.c.l.b16 %v81
    %v135 = vunpack.c.h.b16 %v81
    %v136 = vunpack.c.l.b16 %v82
    %v137 = vunpack.c.h.b16 %v82
    %v138 = vunpack.c.l.b16 %v83
    %v139 = vunpack.c.h.b16 %v83
    %v140 = vunpack.c.l.b16 %v84
    %v141 = vunpack.c.h.b16 %v84
    %v142 = vunpack.c.l.b16 %v85
    %v143 = vunpack.c.h.b16 %v85
    %v144 = vunpack.c.l.b16 %v86
    %v145 = vunpack.c.h.b16 %v86
    %v146 = vunpack.c.l.b16 %v87
    %v147 = vunpack.c.h.b16 %v87
    %v148 = vpack.c.b16 %v118, %v116
    %v149 = vpack.c.b16 %v119, %v117
    %v150 = vpack.c.b16 %v122, %v120
    %v151 = vpack.c.b16 %v123, %v121
    %v152 = vpack.c.b16 %v126, %v124
    %v153 = vpack.c.b16 %v127, %v125
    %v154 = vpack.c.b16 %v130, %v128
    %v155 = vpack.c.b16 %v131, %v129
    %v156 = vpack.c.b16 %v134, %v132
    %v157 = vpack.c.b16 %v135, %v133
    %v158 = vpack.c.b16 %v138, %v136
    %v159 = vpack.c.b16 %v139, %v137
    %v160 = vpack.c.b16 %v142, %v140
    %v161 = vpack.c.b16 %v143, %v141
    %v162 = vpack.c.b16 %v146, %v144
    %v163 = vpack.c.b16 %v147, %v145
    %180 = vmatprep.subr.bf16.mxu0 %v149
    %181 = vmatpush1.bf16.msra.mxu0 %v148
    %182 = vmatprep.subr.bf16.mxu0 %v151
    %183 = vmatpush1.bf16.msra.mxu0 %v150
    %184 = vmatprep.subr.bf16.mxu0 %v153
    %185 = vmatpush1.bf16.msra.mxu0 %v152
    %186 = vmatprep.subr.bf16.mxu0 %v155
    %187 = vmatpush1.bf16.msra.mxu0 %v154
    %188 = vmatprep.subr.bf16.mxu0 %v157
    %189 = vmatpush1.bf16.msra.mxu0 %v156
    %190 = vmatprep.subr.bf16.mxu0 %v159
    %191 = vmatpush1.bf16.msra.mxu0 %v158
    %192 = vmatprep.subr.bf16.mxu0 %v161
    %193 = vmatpush1.bf16.msra.mxu0 %v160
    %194 = vmatprep.subr.bf16.mxu0 %v163
    %195 = vmatpush1.bf16.msra.mxu0 %v162
    %196 = vmatprep.subr.bf16.mxu0 0
    %197 = vmatpush1.bf16.msra.mxu0 0
    %198 = vmatprep.subr.bf16.mxu0 0
    %199 = vmatpush1.bf16.msra.mxu0 0
    %200 = vmatprep.subr.bf16.mxu0 0
    %201 = vmatpush1.bf16.msra.mxu0 0
    %202 = vmatprep.subr.bf16.mxu0 0
    %203 = vmatpush1.bf16.msra.mxu0 0
    %204 = vmatprep.subr.bf16.mxu0 0
    %205 = vmatpush1.bf16.msra.mxu0 0
    %206 = vmatprep.subr.bf16.mxu0 0
    %207 = vmatpush1.bf16.msra.mxu0 0
    %208 = vmatprep.subr.bf16.mxu0 0
    %209 = vmatpush1.bf16.msra.mxu0 0
    %210 = vmatprep.subr.bf16.mxu0 0
    %211 = vmatpush1.bf16.msra.mxu0 0
    %212 = vmatprep.mubr.bf16.mxu0 0
    %213 = vmatmul.mubr.bf16.gmra.mrb[0].mxu0 %v71
    %v214 = vpop.f32.mrb[0].mxu0
    %v215 = vadd.f32 %v93, %v214
    %v216 = vpop.f32.mrb[0].mxu0
    %v217 = vadd.f32 %v97, %v216
    %v218 = vpop.f32.mrb[0].mxu0
    %v219 = vadd.f32 %v93, %v218
    %v220 = vpop.f32.mrb[0].mxu0
    %v221 = vadd.f32 %v97, %v220
    %222 = vdwg.mxu0
    %v223 = vmul.f32 %v215, 0.5
    %v224 = vmul.f32 %v217, 0.5
    %v225 = vmul.f32 %v219, 0.5
    %v226 = vmul.f32 %v221, 0.5
    %v227 = vmul.f32 %v215, 0.70710677
    %v228 = vmul.f32 %v217, 0.70710677
    %v229 = vmul.f32 %v219, 0.70710677
    %v230 = vmul.f32 %v221, 0.70710677
    %v231 = vand.u32 2147483647, %v227
    %v232 = vand.u32 2147483647, %v228
    %v233 = vand.u32 2147483647, %v229
    %v234 = vand.u32 2147483647, %v230
    %v235 = vmul.f32 %v231, 0.3275911
    %v236 = vmul.f32 %v232, 0.3275911
    %v237 = vmul.f32 %v233, 0.3275911
    %v238 = vmul.f32 %v234, 0.3275911
    %v239 = vadd.f32 %v235, 1.0
    %v240 = vadd.f32 %v236, 1.0
    %v241 = vadd.f32 %v237, 1.0
    %v242 = vadd.f32 %v238, 1.0
    %v243 = vrcp.pop %v239
    %v244 = vmul.f32 1.0, %v243
    %v245 = vrcp.pop %v240
    %v246 = vmul.f32 1.0, %v245
    %v247 = vrcp.pop %v241
    %v248 = vmul.f32 1.0, %v247
    %v249 = vrcp.pop %v242
    %v250 = vmul.f32 1.0, %v249
    %v251 = vmul.f32 %v244, 1.0614054
    %v252 = vmul.f32 %v246, 1.0614054
    %v253 = vmul.f32 %v248, 1.0614054
    %v254 = vmul.f32 %v250, 1.0614054
    %v255 = vadd.f32 %v251, -1.4531521
    %v256 = vadd.f32 %v252, -1.4531521
    %v257 = vadd.f32 %v253, -1.4531521
    %v258 = vadd.f32 %v254, -1.4531521
    %v259 = vmul.f32 %v255, %v244
    %v260 = vmul.f32 %v256, %v246
    %v261 = vmul.f32 %v257, %v248
    %v262 = vmul.f32 %v258, %v250
    %v263 = vadd.f32 %v259, 1.4214138
    %v264 = vadd.f32 %v260, 1.4214138
    %v265 = vadd.f32 %v261, 1.4214138
    %v266 = vadd.f32 %v262, 1.4214138
    %v267 = vmul.f32 %v263, %v244
    %v268 = vmul.f32 %v264, %v246
    %v269 = vmul.f32 %v265, %v248
    %v270 = vmul.f32 %v266, %v250
    %v271 = vadd.f32 %v267, -0.28449672
    %v272 = vadd.f32 %v268, -0.28449672
    %v273 = vadd.f32 %v269, -0.28449672
    %v274 = vadd.f32 %v270, -0.28449672
    %v275 = vmul.f32 %v271, %v244
    %v276 = vmul.f32 %v272, %v246
    %v277 = vmul.f32 %v273, %v248
    %v278 = vmul.f32 %v274, %v250
    %v279 = vadd.f32 %v275, 0.2548296
    %v280 = vadd.f32 %v276, 0.2548296
    %v281 = vadd.f32 %v277, 0.2548296
    %v282 = vadd.f32 %v278, 0.2548296
    %v283 = vmul.f32 %v279, %v244
    %v284 = vmul.f32 %v280, %v246
    %v285 = vmul.f32 %v281, %v248
    %v286 = vmul.f32 %v282, %v250
    %v287 = vsub.f32 0.0, %v231
    %v288 = vsub.f32 0.0, %v232
    %v289 = vsub.f32 0.0, %v233
    %v290 = vsub.f32 0.0, %v234
    %v291 = vmul.f32 %v287, %v231
    %v292 = vmul.f32 %v288, %v232
    %v293 = vmul.f32 %v289, %v233
    %v294 = vmul.f32 %v290, %v234
    %v295 = vmul.f32 %v291, 1.442695
    %v296 = vpow.pop %v295
    %v297 = vmul.f32 %v292, 1.442695
    %v298 = vpow.pop %v297
    %v299 = vmul.f32 %v293, 1.442695
    %v300 = vpow.pop %v299
    %v301 = vmul.f32 %v294, 1.442695
    %v302 = vpow.pop %v301
    %v303 = vmul.f32 %v283, %v296
    %v304 = vmul.f32 %v284, %v298
    %v305 = vmul.f32 %v285, %v300
    %v306 = vmul.f32 %v286, %v302
    %v307 = vsub.f32 1.0, %v303
    %v308 = vsub.f32 1.0, %v304
    %v309 = vsub.f32 1.0, %v305
    %v310 = vsub.f32 1.0, %v306
    %vm311 = vcmp.ge.f32.partialorder %v227, 0.0
    %vm312 = vcmp.ge.f32.partialorder %v228, 0.0
    %vm313 = vcmp.ge.f32.partialorder %v229, 0.0
    %vm314 = vcmp.ge.f32.partialorder %v230, 0.0
    %v315 = vsub.f32 0.0, %v307
    %v316 = vsub.f32 0.0, %v308
    %v317 = vsub.f32 0.0, %v309
    %v318 = vsub.f32 0.0, %v310
    %v319 = vsel %vm311, %v307, %v315
    %v320 = vsel %vm312, %v308, %v316
    %v321 = vsel %vm313, %v309, %v317
    %v322 = vsel %vm314, %v310, %v318
    %v323 = vadd.f32 %v319, 1.0
    %v324 = vadd.f32 %v320, 1.0
    %v325 = vadd.f32 %v321, 1.0
    %v326 = vadd.f32 %v322, 1.0
    %v327 = vmul.f32 %v223, %v323
    %v328 = vmul.f32 %v224, %v324
    %v329 = vmul.f32 %v225, %v325
    %v330 = vmul.f32 %v226, %v326
    %v331 = vld [vmem:[#allocation2] sm:$0xff]
    %v332 = vld [vmem:[#allocation2 + $0x8] sm:$0xff]
    %v333 = vpack.c.bf16 %v329, %v327
    %v334 = vpack.c.bf16 %v330, %v328
    %v335 = vld [vmem:[#allocation8] sm:$0xf]
    %v336 = vld [vmem:[#allocation8 + $0x4] sm:$0xf]
    %v337 = vld [vmem:[#allocation8 + $0x8] sm:$0xf]
    %v338 = vld [vmem:[#allocation8 + $0xc] sm:$0xf]
    %v339 = vld [vmem:[#allocation8 + $0x10] sm:$0xf]
    %v340 = vld [vmem:[#allocation8 + $0x14] sm:$0xf]
    %v341 = vld [vmem:[#allocation8 + $0x18] sm:$0xf]
    %v342 = vld [vmem:[#allocation8 + $0x1c] sm:$0xf]
    %v343 = vld [vmem:[#allocation8 + $0x20] sm:$0xf]
    %v344 = vld [vmem:[#allocation8 + $0x24] sm:$0xf]
    %v345 = vld [vmem:[#allocation8 + $0x28] sm:$0xf]
    %v346 = vld [vmem:[#allocation8 + $0x2c] sm:$0xf]
    %v347 = vld [vmem:[#allocation8 + $0x30] sm:$0xf]
    %v348 = vld [vmem:[#allocation8 + $0x34] sm:$0xf]
    %v349 = vld [vmem:[#allocation8 + $0x38] sm:$0xf]
    %v350 = vld [vmem:[#allocation8 + $0x3c] sm:$0xf]
    %v351 = vld [vmem:[#allocation8 + $0x40] sm:$0xf]
    %v352 = vld [vmem:[#allocation8 + $0x44] sm:$0xf]
    %v353 = vld [vmem:[#allocation8 + $0x48] sm:$0xf]
    %v354 = vld [vmem:[#allocation8 + $0x4c] sm:$0xf]
    %v355 = vld [vmem:[#allocation8 + $0x50] sm:$0xf]
    %v356 = vld [vmem:[#allocation8 + $0x54] sm:$0xf]
    %v357 = vld [vmem:[#allocation8 + $0x58] sm:$0xf]
    %v358 = vld [vmem:[#allocation8 + $0x5c] sm:$0xf]
    %v359 = vld [vmem:[#allocation8 + $0x60] sm:$0xf]
    %v360 = vld [vmem:[#allocation8 + $0x64] sm:$0xf]
    %v361 = vld [vmem:[#allocation8 + $0x68] sm:$0xf]
    %v362 = vld [vmem:[#allocation8 + $0x6c] sm:$0xf]
    %v363 = vld [vmem:[#allocation8 + $0x70] sm:$0xf]
    %v364 = vld [vmem:[#allocation8 + $0x74] sm:$0xf]
    %v365 = vld [vmem:[#allocation8 + $0x78] sm:$0xf]
    %v366 = vld [vmem:[#allocation8 + $0x7c] sm:$0xf]
    %v399 = vunpack.c.l.b16 %v335
    %v400 = vunpack.c.l.b16 %v336
    %v401 = vunpack.c.l.b16 %v337
    %v402 = vunpack.c.l.b16 %v338
    %v403 = vunpack.c.l.b16 %v339
    %v404 = vunpack.c.l.b16 %v340
    %v405 = vunpack.c.l.b16 %v341
    %v406 = vunpack.c.l.b16 %v342
    %v407 = vunpack.c.l.b16 %v343
    %v408 = vunpack.c.l.b16 %v344
    %v409 = vunpack.c.l.b16 %v345
    %v410 = vunpack.c.l.b16 %v346
    %v411 = vunpack.c.l.b16 %v347
    %v412 = vunpack.c.l.b16 %v348
    %v413 = vunpack.c.l.b16 %v349
    %v414 = vunpack.c.l.b16 %v350
    %v415 = vunpack.c.l.b16 %v351
    %v416 = vunpack.c.l.b16 %v352
    %v417 = vunpack.c.l.b16 %v353
    %v418 = vunpack.c.l.b16 %v354
    %v419 = vunpack.c.l.b16 %v355
    %v420 = vunpack.c.l.b16 %v356
    %v421 = vunpack.c.l.b16 %v357
    %v422 = vunpack.c.l.b16 %v358
    %v423 = vunpack.c.l.b16 %v359
    %v424 = vunpack.c.l.b16 %v360
    %v425 = vunpack.c.l.b16 %v361
    %v426 = vunpack.c.l.b16 %v362
    %v427 = vunpack.c.l.b16 %v363
    %v428 = vunpack.c.l.b16 %v364
    %v429 = vunpack.c.l.b16 %v365
    %v430 = vunpack.c.l.b16 %v366
    %v431 = vpack.c.b16 %v400, %v399
    %v432 = vpack.c.b16 %v402, %v401
    %v433 = vpack.c.b16 %v404, %v403
    %v434 = vpack.c.b16 %v406, %v405
    %v435 = vpack.c.b16 %v408, %v407
    %v436 = vpack.c.b16 %v410, %v409
    %v437 = vpack.c.b16 %v412, %v411
    %v438 = vpack.c.b16 %v414, %v413
    %v439 = vpack.c.b16 %v416, %v415
    %v440 = vpack.c.b16 %v418, %v417
    %v441 = vpack.c.b16 %v420, %v419
    %v442 = vpack.c.b16 %v422, %v421
    %v443 = vpack.c.b16 %v424, %v423
    %v444 = vpack.c.b16 %v426, %v425
    %v445 = vpack.c.b16 %v428, %v427
    %v446 = vpack.c.b16 %v430, %v429
    %463 = vmatprep.subr.bf16.mxu0 0
    %464 = vmatpush1.bf16.msra.mxu0 %v431
    %465 = vmatprep.subr.bf16.mxu0 0
    %466 = vmatpush1.bf16.msra.mxu0 %v432
    %467 = vmatprep.subr.bf16.mxu0 0
    %468 = vmatpush1.bf16.msra.mxu0 %v433
    %469 = vmatprep.subr.bf16.mxu0 0
    %470 = vmatpush1.bf16.msra.mxu0 %v434
    %471 = vmatprep.subr.bf16.mxu0 0
    %472 = vmatpush1.bf16.msra.mxu0 %v435
    %473 = vmatprep.subr.bf16.mxu0 0
    %474 = vmatpush1.bf16.msra.mxu0 %v436
    %475 = vmatprep.subr.bf16.mxu0 0
    %476 = vmatpush1.bf16.msra.mxu0 %v437
    %477 = vmatprep.subr.bf16.mxu0 0
    %478 = vmatpush1.bf16.msra.mxu0 %v438
    %479 = vmatprep.subr.bf16.mxu0 0
    %480 = vmatpush1.bf16.msra.mxu0 %v439
    %481 = vmatprep.subr.bf16.mxu0 0
    %482 = vmatpush1.bf16.msra.mxu0 %v440
    %483 = vmatprep.subr.bf16.mxu0 0
    %484 = vmatpush1.bf16.msra.mxu0 %v441
    %485 = vmatprep.subr.bf16.mxu0 0
    %486 = vmatpush1.bf16.msra.mxu0 %v442
    %487 = vmatprep.subr.bf16.mxu0 0
    %488 = vmatpush1.bf16.msra.mxu0 %v443
    %489 = vmatprep.subr.bf16.mxu0 0
    %490 = vmatpush1.bf16.msra.mxu0 %v444
    %491 = vmatprep.subr.bf16.mxu0 0
    %492 = vmatpush1.bf16.msra.mxu0 %v445
    %493 = vmatprep.subr.bf16.mxu0 0
    %494 = vmatpush1.bf16.msra.mxu0 %v446
    %495 = vmatprep.mubr.bf16.mxu0 %v334
    %496 = vmatmul.mubr.bf16.gmra.mrb[0].mxu0 %v333
    %v497 = vpop.f32.mrb[0].mxu0
    %v498 = vadd.f32 0.0, %v497
    %v499 = vpop.f32.mrb[0].mxu0
    %v500 = vpop.f32.mrb[0].mxu0
    %v501 = vadd.f32 0.0, %v500
    %v502 = vpop.f32.mrb[0].mxu0
    %503 = vdwg.mxu0
    %v504 = vadd.f32 %v331, %v498
    %v505 = vadd.f32 %v332, %v501
    %506 = vst [vmem:[#allocation2] sm:$0xff] %v504
    %507 = vst [vmem:[#allocation2 + $0x8] sm:$0xff] %v505
    // Predicated region
    $region38: #{tpu_custom_call.1} parent=1 // pred_check
      %p508 = pneg %p63
    $region39: #{tpu_custom_call.1} parent=1 // pred_check_branch
      %510 = sbr.rel (%p508) target = $region41
    $region40: #{tpu_custom_call.1} parent=1 // pred_region
      %v511 = vld [vmem:[#allocation2] sm:$0xff]
      %v512 = vld [vmem:[#allocation2 + $0x8] sm:$0xff]
      %v513 = vld [vmem:[%s4] sm:$0x1]
      %v515 = vlaneseq
      %v516 = vshrl.u32 %v515, 7
      %v517 = vsub.s32 0, %v516
      %v518 = vrot.slane %v513, %v517
      %v520 = vadd.f32 %v511, %v518
      %v521 = vadd.f32 %v512, %v518
      %522 = vst [vmem:[#allocation9] sm:$0xff] %v520
      %523 = vst [vmem:[#allocation9 + $0x8] sm:$0xff] %v521
    $region41: #{tpu_custom_call.1} parent=1 // pred_fallthru
      _
    // Predicated region
    $region42: #{tpu_custom_call.1} parent=1 // pred_check
      _
    $region43: #{tpu_custom_call.1} parent=1 // pred_check_branch
      %525 = sbr.rel (0) target = $region45
    $region44: #{tpu_custom_call.1} parent=1 // pred_region
      %s527 = ssub.s32 256, 256
      %528 = vsyncadd [#allocation5], %s527
      %s529 = sshll.u32 [#allocation9], 4
      %s530 = int_to_ptr.vmem [resolvable:$true] %s529
      %535 = dma.vmem_to_hbm [thread:$0]  %s530, 256, %s5, [#allocation5], 128, 128, 8
    $region45: #{tpu_custom_call.1} parent=1 // pred_fallthru
      _
    // Predicated region
    $region46: #{tpu_custom_call.1} parent=1 // pred_check
      _
    $region47: #{tpu_custom_call.1} parent=1 // pred_check_branch
      %537 = sbr.rel (0) target = $region49
    $region48: #{tpu_custom_call.1} parent=1 // pred_region
      %538 = dma.done [#allocation5], 256
    $region49: #{tpu_custom_call.1} parent=1 // pred_fallthru
      _
    %539 = vsyncpa [#allocation4], 1
    %540 = vsyncpa [#allocation7], 1
    %541 = vsyncpa [#allocation5], 1

</llo_original>
